<compile_context>
chip_gen: v6e
topology: v6e:2x2x1
jax: 0.10.0
libtpu: 0.0.40
codegen_flags: <defaults>
</compile_context>

<pallas_src>
import functools

import jax
import jax.numpy as jnp
from jax.experimental import pallas as pl
from jax.experimental.pallas import tpu as pltpu

LN_EPS = 1e-5


def glmix_kernel(x_ref, w1_ref, b1_ref, g_ref, beta_ref, w2_ref, b2_ref, o_ref):
    # x tile: (TM, D) in its native dtype -> MXU runs at native (e.g. bf16) rate,
    # f32 accumulation comes free via preferred_element_type.
    x = x_ref[...]

    # Linear 1: (TM, D) @ (D, H) + b1
    h = jnp.dot(x, w1_ref[...], preferred_element_type=jnp.float32)
    h = h + b1_ref[...].astype(jnp.float32)

    # LayerNorm over last dim -- one-pass variance: E[h^2] - mu^2
    mu = jnp.mean(h, axis=-1, keepdims=True)
    var = jnp.mean(h * h, axis=-1, keepdims=True) - mu * mu
    var = jnp.maximum(var, 0.0)  # guard tiny negative values from cancellation
    hn = (h - mu) * jax.lax.rsqrt(var + LN_EPS)
    hn = hn * g_ref[...].astype(jnp.float32) + beta_ref[...].astype(jnp.float32)

    # Dropout(p=0.25) -> identity at inference.  ReLU:
    hn = jnp.maximum(hn, 0.0)

    # Linear 2: (TM, H) @ (H, D) + b2  (cast activations to weight dtype so the
    # MXU stays at native rate when weights are bf16; no-op for f32).
    y = jnp.dot(hn.astype(w2_ref.dtype), w2_ref[...],
                preferred_element_type=jnp.float32)
    y = y + b2_ref[...].astype(jnp.float32)

    # Gated residual: sigmoid(y) * x + x == x * (sigmoid(y) + 1)
    gate = jax.nn.sigmoid(y) + 1.0
    o_ref[...] = (x.astype(jnp.float32) * gate).astype(o_ref.dtype)


@functools.partial(jax.jit, static_argnames=("tm",))
def glmix_forward(x, w1, b1, gamma, beta, w2, b2, *, tm=512):
    """x: (B, T, D) or (M, D). Returns same shape/dtype as x."""
    orig_shape = x.shape
    D = orig_shape[-1]
    x2 = x.reshape(-1, D)
    M = x2.shape[0]
    H = w1.shape[1]

    # Pad rows only up to a multiple of 8 (sublane granularity).  The ragged
    # last *tile* is handled by the cdiv grid + Pallas boundary masking, so we
    # never materialize a full tm-padded copy of x in HBM.
    M8 = ((M + 7) // 8) * 8
    if M8 != M:
        x2 = jnp.pad(x2, ((0, M8 - M), (0, 0)))

    # Row tile: large to amortize per-step overhead / fill MXU rows, clamped
    # for small inputs.  (tm must be a multiple of 8.)
    tm_eff = min(tm, M8)
    grid = (pl.cdiv(M8, tm_eff),)

    b1r = b1.reshape(1, H)
    gr = gamma.reshape(1, H)
    br = beta.reshape(1, H)
    b2r = b2.reshape(1, D)

    # VMEM budget (v7x: 64 MiB physical / 32 MiB scoped default):
    #   single-buffered weights/bias/LN params
    # + double-buffered x and out row tiles
    # + f32 intermediates (h, hn, y, gate, ...).
    isz_x = x.dtype.itemsize
    isz_w = w1.dtype.itemsize
    vmem_need = ((D * H + H * D + 4 * H + 2 * D) * isz_w
                 + 2 * 2 * tm_eff * D * isz_x
                 + 6 * tm_eff * max(D, H) * 4)
    vmem_limit = int(min(max(vmem_need + (8 << 20), 32 << 20), 56 << 20))

    # Weights / biases are re-read at the same block index every grid step:
    # single-buffer them so the saved VMEM can go to a larger row tile.
    const_mode = pl.Buffered(buffer_count=1)

    cost = pl.CostEstimate(
        flops=4 * M8 * D * H,                       # two matmuls
        transcendentals=M8 * (D + H),               # sigmoid + rsqrt
        bytes_accessed=2 * M8 * D * isz_x + (2 * D * H + 2 * H + 2 * D) * isz_w,
    )

    out = pl.pallas_call(
        glmix_kernel,
        out_shape=jax.ShapeDtypeStruct((M8, D), x.dtype),
        grid_spec=pltpu.PrefetchScalarGridSpec(
            num_scalar_prefetch=0,
            grid=grid,
            in_specs=[
                pl.BlockSpec((tm_eff, D), lambda i: (i, 0)),          # x rows tile
                pl.BlockSpec((D, H), lambda i: (0, 0),
                             pipeline_mode=const_mode),               # W1 (full)
                pl.BlockSpec((1, H), lambda i: (0, 0),
                             pipeline_mode=const_mode),               # b1
                pl.BlockSpec((1, H), lambda i: (0, 0),
                             pipeline_mode=const_mode),               # LN gamma
                pl.BlockSpec((1, H), lambda i: (0, 0),
                             pipeline_mode=const_mode),               # LN beta
                pl.BlockSpec((H, D), lambda i: (0, 0),
                             pipeline_mode=const_mode),               # W2 (full)
                pl.BlockSpec((1, D), lambda i: (0, 0),
                             pipeline_mode=const_mode),               # b2
            ],
            out_specs=pl.BlockSpec((tm_eff, D), lambda i: (i, 0)),
        ),
        compiler_params=pltpu.CompilerParams(
            dimension_semantics=("parallel",),
            vmem_limit_bytes=vmem_limit),
        cost_estimate=cost,
    )(x2, w1, b1r, gr, br, w2, b2r)

    if M8 != M:
        out = out[:M]
    return out.reshape(orig_shape)


def init_params(key, input_dim, hdim1, dtype=jnp.float32):
    """Deterministic synthetic init matching nn.Linear / nn.LayerNorm shapes."""
    k1, k2, k3, k4 = jax.random.split(key, 4)
    lim1 = 1.0 / (input_dim ** 0.5)
    lim2 = 1.0 / (hdim1 ** 0.5)
    # Stored as (in, out) so the kernel does x @ W.
    w1 = jax.random.uniform(k1, (input_dim, hdim1), dtype, -lim1, lim1)
    b1 = jax.random.uniform(k2, (hdim1,), dtype, -lim1, lim1)
    gamma = jnp.ones((hdim1,), dtype)
    beta = jnp.zeros((hdim1,), dtype)
    w2 = jax.random.uniform(k3, (hdim1, input_dim), dtype, -lim2, lim2)
    b2 = jax.random.uniform(k4, (input_dim,), dtype, -lim2, lim2)
    return w1, b1, gamma, beta, w2, b2


def glmix_ref(x, w1, b1, gamma, beta, w2, b2):
    """Pure-JAX reference (PyTorch eval semantics, centered variance)."""
    h = x.astype(jnp.float32) @ w1.astype(jnp.float32) + b1.astype(jnp.float32)
    mu = jnp.mean(h, axis=-1, keepdims=True)
    var = jnp.mean((h - mu) ** 2, axis=-1, keepdims=True)
    hn = (h - mu) / jnp.sqrt(var + LN_EPS) * gamma + beta
    hn = jnp.maximum(hn, 0.0)
    y = hn @ w2.astype(jnp.float32) + b2.astype(jnp.float32)
    p = jax.nn.sigmoid(y)
    xf = x.astype(jnp.float32)
    return (p * xf + xf).astype(x.dtype)


if __name__ == "__main__":
    # Small, lane-dense shapes consistent with the module (defaults 1024/512):
    # batch=2, seq=8, input_dim=256, hdim1=128 (multiples of 128 -> dense vst).
    B, T, D, H = 2, 8, 256, 128
    key = jax.random.PRNGKey(0)
    kx, kp = jax.random.split(key)
    x = jax.random.normal(kx, (B, T, D), jnp.float32)
    params = init_params(kp, D, H)

    out = glmix_forward(x, *params)
    out = jax.block_until_ready(out)

    ref = glmix_ref(x, *params)
    assert out.shape == x.shape and out.dtype == x.dtype
    assert jnp.allclose(out, ref, atol=1e-4, rtol=1e-4), "mismatch vs reference"

    print("KERNEL_OK")
</pallas_src>

<mosaic_0001>
module attributes {stable_mosaic.version = 11 : i64} {
  func.func @glmix_kernel(%arg0: i32, %arg1: memref<16x256xf32, #tpu.memory_space<vmem>>, %arg2: memref<256x128xf32, #tpu.memory_space<vmem>>, %arg3: memref<1x128xf32, #tpu.memory_space<vmem>>, %arg4: memref<1x128xf32, #tpu.memory_space<vmem>>, %arg5: memref<1x128xf32, #tpu.memory_space<vmem>>, %arg6: memref<128x256xf32, #tpu.memory_space<vmem>>, %arg7: memref<1x256xf32, #tpu.memory_space<vmem>>, %arg8: memref<16x256xf32, #tpu.memory_space<vmem>>) attributes {dimension_semantics = [#tpu.dimension_semantics<parallel>], iteration_bounds = array<i64: 1>, scalar_prefetch = 0 : i64, scratch_operands = 0 : i64, tpu.core_type = #tpu.core_type<tc>, window_params = [{transform_indices = @transform_0, window_bounds = array<i64: 16, 256>}, {pipeline_mode = #tpu.pipeline_mode<synchronous>, transform_indices = @transform_1, window_bounds = array<i64: 256, 128>}, {pipeline_mode = #tpu.pipeline_mode<synchronous>, transform_indices = @transform_2, window_bounds = array<i64: 1, 128>}, {pipeline_mode = #tpu.pipeline_mode<synchronous>, transform_indices = @transform_3, window_bounds = array<i64: 1, 128>}, {pipeline_mode = #tpu.pipeline_mode<synchronous>, transform_indices = @transform_4, window_bounds = array<i64: 1, 128>}, {pipeline_mode = #tpu.pipeline_mode<synchronous>, transform_indices = @transform_5, window_bounds = array<i64: 128, 256>}, {pipeline_mode = #tpu.pipeline_mode<synchronous>, transform_indices = @transform_6, window_bounds = array<i64: 1, 256>}, {transform_indices = @transform_7, window_bounds = array<i64: 16, 256>}]} {
    %c0 = arith.constant 0 : index
    %c0_0 = arith.constant 0 : index
    %0 = vector.load %arg1[%c0, %c0_0] : memref<16x256xf32, #tpu.memory_space<vmem>>, vector<16x256xf32>
    %c0_1 = arith.constant 0 : index
    %c0_2 = arith.constant 0 : index
    %1 = vector.load %arg2[%c0_1, %c0_2] : memref<256x128xf32, #tpu.memory_space<vmem>>, vector<256x128xf32>
    %cst = arith.constant dense<0.000000e+00> : vector<16x128xf32>
    %2 = tpu.matmul %0, %1, %cst {dimension_numbers = #tpu.dot_dimension_numbers<[1], [0], [0], [1], [0, 0, 1, 1], [], []>} : vector<16x256xf32>, vector<256x128xf32>, vector<16x128xf32> -> vector<16x128xf32>
    %c0_3 = arith.constant 0 : index
    %c0_4 = arith.constant 0 : index
    %3 = vector.load %arg3[%c0_3, %c0_4] : memref<1x128xf32, #tpu.memory_space<vmem>>, vector<1x128xf32>
    %4 = vector.broadcast %3 : vector<1x128xf32> to vector<16x128xf32>
    %5 = arith.addf %2, %4 : vector<16x128xf32>
    %cst_5 = arith.constant dense<0.000000e+00> : vector<16xf32>
    %6 = vector.multi_reduction <add>, %5, %cst_5 [1] : vector<16x128xf32> to vector<16xf32>
    %7 = vector.shape_cast %6 : vector<16xf32> to vector<16x1xf32>
    %cst_6 = arith.constant 1.280000e+02 : f32
    %8 = vector.broadcast %cst_6 : f32 to vector<16x1xf32>
    %9 = arith.divf %7, %8 : vector<16x1xf32>
    %10 = arith.mulf %5, %5 : vector<16x128xf32>
    %cst_7 = arith.constant dense<0.000000e+00> : vector<16xf32>
    %11 = vector.multi_reduction <add>, %10, %cst_7 [1] : vector<16x128xf32> to vector<16xf32>
    %12 = vector.shape_cast %11 : vector<16xf32> to vector<16x1xf32>
    %cst_8 = arith.constant 1.280000e+02 : f32
    %13 = vector.broadcast %cst_8 : f32 to vector<16x1xf32>
    %14 = arith.divf %12, %13 : vector<16x1xf32>
    %15 = arith.mulf %9, %9 : vector<16x1xf32>
    %16 = arith.subf %14, %15 : vector<16x1xf32>
    %cst_9 = arith.constant 0.000000e+00 : f32
    %17 = vector.broadcast %cst_9 : f32 to vector<16x1xf32>
    %18 = arith.maximumf %16, %17 : vector<16x1xf32>
    %19 = vector.broadcast %9 : vector<16x1xf32> to vector<16x128xf32>
    %20 = arith.subf %5, %19 : vector<16x128xf32>
    %cst_10 = arith.constant 9.99999974E-6 : f32
    %21 = vector.broadcast %cst_10 : f32 to vector<16x1xf32>
    %22 = arith.addf %18, %21 : vector<16x1xf32>
    %23 = math.rsqrt %22 : vector<16x1xf32>
    %24 = vector.broadcast %23 : vector<16x1xf32> to vector<16x128xf32>
    %25 = arith.mulf %20, %24 : vector<16x128xf32>
    %c0_11 = arith.constant 0 : index
    %c0_12 = arith.constant 0 : index
    %26 = vector.load %arg4[%c0_11, %c0_12] : memref<1x128xf32, #tpu.memory_space<vmem>>, vector<1x128xf32>
    %27 = vector.broadcast %26 : vector<1x128xf32> to vector<16x128xf32>
    %28 = arith.mulf %25, %27 : vector<16x128xf32>
    %c0_13 = arith.constant 0 : index
    %c0_14 = arith.constant 0 : index
    %29 = vector.load %arg5[%c0_13, %c0_14] : memref<1x128xf32, #tpu.memory_space<vmem>>, vector<1x128xf32>
    %30 = vector.broadcast %29 : vector<1x128xf32> to vector<16x128xf32>
    %31 = arith.addf %28, %30 : vector<16x128xf32>
    %cst_15 = arith.constant 0.000000e+00 : f32
    %32 = vector.broadcast %cst_15 : f32 to vector<16x128xf32>
    %33 = arith.maximumf %31, %32 : vector<16x128xf32>
    %c0_16 = arith.constant 0 : index
    %c0_17 = arith.constant 0 : index
    %34 = vector.load %arg6[%c0_16, %c0_17] : memref<128x256xf32, #tpu.memory_space<vmem>>, vector<128x256xf32>
    %cst_18 = arith.constant dense<0.000000e+00> : vector<16x256xf32>
    %35 = tpu.matmul %33, %34, %cst_18 {dimension_numbers = #tpu.dot_dimension_numbers<[1], [0], [0], [1], [0, 0, 1, 1], [], []>} : vector<16x128xf32>, vector<128x256xf32>, vector<16x256xf32> -> vector<16x256xf32>
    %c0_19 = arith.constant 0 : index
    %c0_20 = arith.constant 0 : index
    %36 = vector.load %arg7[%c0_19, %c0_20] : memref<1x256xf32, #tpu.memory_space<vmem>>, vector<1x256xf32>
    %37 = vector.broadcast %36 : vector<1x256xf32> to vector<16x256xf32>
    %38 = arith.addf %35, %37 : vector<16x256xf32>
    %39 = arith.negf %38 : vector<16x256xf32>
    %40 = math.exp %39 : vector<16x256xf32>
    %cst_21 = arith.constant 1.000000e+00 : f32
    %41 = vector.broadcast %cst_21 : f32 to vector<16x256xf32>
    %42 = arith.addf %41, %40 : vector<16x256xf32>
    %43 = arith.divf %41, %42 : vector<16x256xf32>
    %cst_22 = arith.constant 1.000000e+00 : f32
    %44 = vector.broadcast %cst_22 : f32 to vector<16x256xf32>
    %45 = arith.addf %43, %44 : vector<16x256xf32>
    %46 = arith.mulf %0, %45 : vector<16x256xf32>
    %c0_23 = arith.constant 0 : index
    %c0_24 = arith.constant 0 : index
    %47 = vector.load %arg8[%c0_23, %c0_24] : memref<16x256xf32, #tpu.memory_space<vmem>>, vector<16x256xf32>
    tpu.vector_store %arg8[%c0_23, %c0_24], %46 {strides = array<i32>} : memref<16x256xf32, #tpu.memory_space<vmem>>, vector<16x256xf32>,
    return
  }
  func.func @transform_0(%arg0: i32) -> (i32, i32) {
    %c0_i32 = arith.constant 0 : i32
    %c0_i32_0 = arith.constant 0 : i32
    return %arg0, %c0_i32 : i32, i32
  }
  func.func @transform_1(%arg0: i32) -> (i32, i32) {
    %c0_i32 = arith.constant 0 : i32
    %c0_i32_0 = arith.constant 0 : i32
    %c0_i32_1 = arith.constant 0 : i32
    return %c0_i32, %c0_i32_0 : i32, i32
  }
  func.func @transform_2(%arg0: i32) -> (i32, i32) {
    %c0_i32 = arith.constant 0 : i32
    %c0_i32_0 = arith.constant 0 : i32
    %c0_i32_1 = arith.constant 0 : i32
    return %c0_i32, %c0_i32_0 : i32, i32
  }
  func.func @transform_3(%arg0: i32) -> (i32, i32) {
    %c0_i32 = arith.constant 0 : i32
    %c0_i32_0 = arith.constant 0 : i32
    %c0_i32_1 = arith.constant 0 : i32
    return %c0_i32, %c0_i32_0 : i32, i32
  }
  func.func @transform_4(%arg0: i32) -> (i32, i32) {
    %c0_i32 = arith.constant 0 : i32
    %c0_i32_0 = arith.constant 0 : i32
    %c0_i32_1 = arith.constant 0 : i32
    return %c0_i32, %c0_i32_0 : i32, i32
  }
  func.func @transform_5(%arg0: i32) -> (i32, i32) {
    %c0_i32 = arith.constant 0 : i32
    %c0_i32_0 = arith.constant 0 : i32
    %c0_i32_1 = arith.constant 0 : i32
    return %c0_i32, %c0_i32_0 : i32, i32
  }
  func.func @transform_6(%arg0: i32) -> (i32, i32) {
    %c0_i32 = arith.constant 0 : i32
    %c0_i32_0 = arith.constant 0 : i32
    %c0_i32_1 = arith.constant 0 : i32
    return %c0_i32, %c0_i32_0 : i32, i32
  }
  func.func @transform_7(%arg0: i32) -> (i32, i32) {
    %c0_i32 = arith.constant 0 : i32
    %c0_i32_0 = arith.constant 0 : i32
    return %arg0, %c0_i32 : i32, i32
  }
}

</mosaic_0001>

<llo_original>
// kernel: glmix_forward.1
$region0: #{glmix_forward.1}
  #allocation0 [shape = 'u32[]', space=smem, size = 0x4, offset = 0x4, fixed_abs, tag = 'smem constant byte address 0x4 - core index']
  #allocation1 [shape = 'u32[144,128]{1,0:T(1,128)}', space=vmem, size = 0x12000, scoped, tag = 'internal scratch']
  %s0 = inlined_call_operand.hbm [shape: f32[16,256], index: 0, kind: input, shape index: {}]
  %s1 = inlined_call_operand.hbm [shape: f32[256,128], index: 1, kind: input, shape index: {}]
  %s2 = inlined_call_operand.vmem [shape: f32[1,128], index: 2, kind: input, shape index: {}]
  %s3 = inlined_call_operand.vmem [shape: f32[1,128], index: 3, kind: input, shape index: {}]
  %s4 = inlined_call_operand.vmem [shape: f32[1,128], index: 4, kind: input, shape index: {}]
  %s5 = inlined_call_operand.hbm [shape: f32[128,256], index: 5, kind: input, shape index: {}]
  %s6 = inlined_call_operand.vmem [shape: f32[1,256], index: 6, kind: input, shape index: {}]
  %s7 = inlined_call_operand.hbm [shape: f32[16,256], index: 7, kind: output, shape index: {}]
  %s8 = sld [smem:[#allocation0]]
  $region50: #{glmix_forward.1} parent=0
    _
  %s10 = ssub.s32 1, %s8
  %s11 = scalar_select 0, %s10, %s8
  $region1: #{glmix_forward.1} parent=0
    #allocation2 [shape = 'u8[16384]{0}', space=vmem, size = 0x4000, scoped, tag = 'input window, operand 0, single buffered']
    #allocation3 [shape = 's32[1]{0}', space=sflag, size = 0x4, scoped, tag = 'scoped memory for glmix_forward.1']
    #allocation4 [shape = 's32[1]{0}', space=sflag, size = 0x4, scoped, tag = 'scoped memory for glmix_forward.1']
    #allocation5 [shape = 'u8[131072]{0}', space=vmem, size = 0x20000, scoped, tag = 'input window, operand 1, single buffered']
    #allocation6 [shape = 's32[1]{0}', space=sflag, size = 0x4, scoped, tag = 'scoped memory for glmix_forward.1']
    #allocation7 [shape = 'u8[131072]{0}', space=vmem, size = 0x20000, scoped, tag = 'input window, operand 5, single buffered']
    #allocation8 [shape = 'u8[16384]{0}', space=vmem, size = 0x4000, scoped, tag = 'output window, operand 0, single buffered']
    %12 = vsyncpa [#allocation3], 0
    %13 = vsyncpa [#allocation6], 0
    %14 = vsyncpa [#allocation4], 0
    // Predicated region
    $region2: #{glmix_forward.1} parent=1 // pred_check
      _
    $region3: #{glmix_forward.1} parent=1 // pred_check_branch
      %16 = sbr.rel (0) target = $region5
    $region4: #{glmix_forward.1} parent=1 // pred_region
      %s18 = ssub.s32 512, 512
      %19 = vsyncadd [#allocation3], %s18
      %s20 = sshll.u32 [#allocation2], 4
      %s21 = int_to_ptr.vmem [resolvable:$true] %s20
      %26 = dma.hbm_to_vmem [thread:$0]  %s0, 512, %s21, [#allocation3], 256, 256, 16
    $region5: #{glmix_forward.1} parent=1 // pred_fallthru
      _
    // Predicated region
    $region6: #{glmix_forward.1} parent=1 // pred_check
      _
    $region7: #{glmix_forward.1} parent=1 // pred_check_branch
      %28 = sbr.rel (0) target = $region9
    $region8: #{glmix_forward.1} parent=1 // pred_region
      %s30 = ssub.s32 4096, 4096
      %31 = vsyncadd [#allocation6], %s30
      %s32 = sshll.u32 [#allocation5], 4
      %s33 = int_to_ptr.vmem [resolvable:$true] %s32
      %38 = dma.hbm_to_vmem [thread:$0]  %s1, 4096, %s33, [#allocation6], 128, 128, 8
    $region9: #{glmix_forward.1} parent=1 // pred_fallthru
      _
    // Predicated region
    $region10: #{glmix_forward.1} parent=1 // pred_check
      _
    $region11: #{glmix_forward.1} parent=1 // pred_check_branch
      %40 = sbr.rel (0) target = $region13
    $region12: #{glmix_forward.1} parent=1 // pred_region
      _
    $region13: #{glmix_forward.1} parent=1 // pred_fallthru
      _
    // Predicated region
    $region14: #{glmix_forward.1} parent=1 // pred_check
      _
    $region15: #{glmix_forward.1} parent=1 // pred_check_branch
      %42 = sbr.rel (0) target = $region17
    $region16: #{glmix_forward.1} parent=1 // pred_region
      _
    $region17: #{glmix_forward.1} parent=1 // pred_fallthru
      _
    // Predicated region
    $region18: #{glmix_forward.1} parent=1 // pred_check
      _
    $region19: #{glmix_forward.1} parent=1 // pred_check_branch
      %44 = sbr.rel (0) target = $region21
    $region20: #{glmix_forward.1} parent=1 // pred_region
      _
    $region21: #{glmix_forward.1} parent=1 // pred_fallthru
      _
    // Predicated region
    $region22: #{glmix_forward.1} parent=1 // pred_check
      _
    $region23: #{glmix_forward.1} parent=1 // pred_check_branch
      %46 = sbr.rel (0) target = $region25
    $region24: #{glmix_forward.1} parent=1 // pred_region
      %s48 = ssub.s32 4096, 4096
      %49 = vsyncadd [#allocation6], %s48
      %s50 = sshll.u32 [#allocation7], 4
      %s51 = int_to_ptr.vmem [resolvable:$true] %s50
      %56 = dma.hbm_to_vmem [thread:$0]  %s5, 4096, %s51, [#allocation6], 256, 256, 16
    $region25: #{glmix_forward.1} parent=1 // pred_fallthru
      _
    // Predicated region
    $region26: #{glmix_forward.1} parent=1 // pred_check
      _
    $region27: #{glmix_forward.1} parent=1 // pred_check_branch
      %58 = sbr.rel (0) target = $region29
    $region28: #{glmix_forward.1} parent=1 // pred_region
      _
    $region29: #{glmix_forward.1} parent=1 // pred_fallthru
      _
    // Predicated region
    $region30: #{glmix_forward.1} parent=1 // pred_check
      _
    $region31: #{glmix_forward.1} parent=1 // pred_check_branch
      %60 = sbr.rel (0) target = $region33
    $region32: #{glmix_forward.1} parent=1 // pred_region
      %61 = dma.done [#allocation3], 512
    $region33: #{glmix_forward.1} parent=1 // pred_fallthru
      _
    // Predicated region
    $region34: #{glmix_forward.1} parent=1 // pred_check
      _
    $region35: #{glmix_forward.1} parent=1 // pred_check_branch
      %63 = sbr.rel (0) target = $region37
    $region36: #{glmix_forward.1} parent=1 // pred_region
      %64 = dma.done [#allocation6], 4096
    $region37: #{glmix_forward.1} parent=1 // pred_fallthru
      _
    // Predicated region
    $region38: #{glmix_forward.1} parent=1 // pred_check
      _
    $region39: #{glmix_forward.1} parent=1 // pred_check_branch
      %66 = sbr.rel (0) target = $region41
    $region40: #{glmix_forward.1} parent=1 // pred_region
      %67 = dma.done [#allocation6], 4096
    $region41: #{glmix_forward.1} parent=1 // pred_fallthru
      _
    %v68 = vld [vmem:[#allocation2] sm:$0xff]
    %v69 = vld [vmem:[#allocation2 + $0x8] sm:$0xff]
    %v70 = vld [vmem:[#allocation2 + $0x10] sm:$0xff]
    %v71 = vld [vmem:[#allocation2 + $0x18] sm:$0xff]
    %v72 = vld [vmem:[#allocation5] sm:$0xff]
    %v73 = vld [vmem:[#allocation5 + $0x8] sm:$0xff]
    %v74 = vld [vmem:[#allocation5 + $0x10] sm:$0xff]
    %v75 = vld [vmem:[#allocation5 + $0x18] sm:$0xff]
    %v76 = vld [vmem:[#allocation5 + $0x20] sm:$0xff]
    %v77 = vld [vmem:[#allocation5 + $0x28] sm:$0xff]
    %v78 = vld [vmem:[#allocation5 + $0x30] sm:$0xff]
    %v79 = vld [vmem:[#allocation5 + $0x38] sm:$0xff]
    %v80 = vld [vmem:[#allocation5 + $0x40] sm:$0xff]
    %v81 = vld [vmem:[#allocation5 + $0x48] sm:$0xff]
    %v82 = vld [vmem:[#allocation5 + $0x50] sm:$0xff]
    %v83 = vld [vmem:[#allocation5 + $0x58] sm:$0xff]
    %v84 = vld [vmem:[#allocation5 + $0x60] sm:$0xff]
    %v85 = vld [vmem:[#allocation5 + $0x68] sm:$0xff]
    %v86 = vld [vmem:[#allocation5 + $0x70] sm:$0xff]
    %v87 = vld [vmem:[#allocation5 + $0x78] sm:$0xff]
    %v88 = vld [vmem:[#allocation5 + $0x80] sm:$0xff]
    %v89 = vld [vmem:[#allocation5 + $0x88] sm:$0xff]
    %v90 = vld [vmem:[#allocation5 + $0x90] sm:$0xff]
    %v91 = vld [vmem:[#allocation5 + $0x98] sm:$0xff]
    %v92 = vld [vmem:[#allocation5 + $0xa0] sm:$0xff]
    %v93 = vld [vmem:[#allocation5 + $0xa8] sm:$0xff]
    %v94 = vld [vmem:[#allocation5 + $0xb0] sm:$0xff]
    %v95 = vld [vmem:[#allocation5 + $0xb8] sm:$0xff]
    %v96 = vld [vmem:[#allocation5 + $0xc0] sm:$0xff]
    %v97 = vld [vmem:[#allocation5 + $0xc8] sm:$0xff]
    %v98 = vld [vmem:[#allocation5 + $0xd0] sm:$0xff]
    %v99 = vld [vmem:[#allocation5 + $0xd8] sm:$0xff]
    %v100 = vld [vmem:[#allocation5 + $0xe0] sm:$0xff]
    %v101 = vld [vmem:[#allocation5 + $0xe8] sm:$0xff]
    %v102 = vld [vmem:[#allocation5 + $0xf0] sm:$0xff]
    %v103 = vld [vmem:[#allocation5 + $0xf8] sm:$0xff]
    %v104 = vld [vmem:[%s2] sm:$0x1]
    %v106 = vlaneseq
    %v107 = vshrl.u32 %v106, 7
    %v108 = vsub.s32 0, %v107
    %v109 = vrot.slane %v104, %v108
    %111 = vmatprep.subr.mxu0 0.0
    %112 = vmatpush1.msra.mxu0 %v87
    %113 = vmatprep.subr.mxu0 0.0
    %114 = vmatpush1.msra.mxu0 %v86
    %115 = vmatprep.subr.mxu0 0.0
    %116 = vmatpush1.msra.mxu0 %v85
    %117 = vmatprep.subr.mxu0 0.0
    %118 = vmatpush1.msra.mxu0 %v84
    %119 = vmatprep.subr.mxu0 0.0
    %120 = vmatpush1.msra.mxu0 %v83
    %121 = vmatprep.subr.mxu0 0.0
    %122 = vmatpush1.msra.mxu0 %v82
    %123 = vmatprep.subr.mxu0 0.0
    %124 = vmatpush1.msra.mxu0 %v81
    %125 = vmatprep.subr.mxu0 0.0
    %126 = vmatpush1.msra.mxu0 %v80
    %127 = vmatprep.subr.mxu0 0.0
    %128 = vmatpush1.msra.mxu0 %v79
    %129 = vmatprep.subr.mxu0 0.0
    %130 = vmatpush1.msra.mxu0 %v78
    %131 = vmatprep.subr.mxu0 0.0
    %132 = vmatpush1.msra.mxu0 %v77
    %133 = vmatprep.subr.mxu0 0.0
    %134 = vmatpush1.msra.mxu0 %v76
    %135 = vmatprep.subr.mxu0 0.0
    %136 = vmatpush1.msra.mxu0 %v75
    %137 = vmatprep.subr.mxu0 0.0
    %138 = vmatpush1.msra.mxu0 %v74
    %139 = vmatprep.subr.mxu0 0.0
    %140 = vmatpush1.msra.mxu0 %v73
    %141 = vmatprep.subr.mxu0 0.0
    %142 = vmatpush1.msra.mxu0 %v72
    %143 = vmatprep.subr.mxu0 0.0
    %144 = vmatpush2.msra.mxu0 %v103
    %145 = vmatprep.subr.mxu0 0.0
    %146 = vmatpush2.msra.mxu0 %v102
    %147 = vmatprep.subr.mxu0 0.0
    %148 = vmatpush2.msra.mxu0 %v101
    %149 = vmatprep.subr.mxu0 0.0
    %150 = vmatpush2.msra.mxu0 %v100
    %151 = vmatprep.subr.mxu0 0.0
    %152 = vmatpush2.msra.mxu0 %v99
    %153 = vmatprep.subr.mxu0 0.0
    %154 = vmatpush2.msra.mxu0 %v98
    %155 = vmatprep.subr.mxu0 0.0
    %156 = vmatpush2.msra.mxu0 %v97
    %157 = vmatprep.subr.mxu0 0.0
    %158 = vmatpush2.msra.mxu0 %v96
    %159 = vmatprep.subr.mxu0 0.0
    %160 = vmatpush2.msra.mxu0 %v95
    %161 = vmatprep.subr.mxu0 0.0
    %162 = vmatpush2.msra.mxu0 %v94
    %163 = vmatprep.subr.mxu0 0.0
    %164 = vmatpush2.msra.mxu0 %v93
    %165 = vmatprep.subr.mxu0 0.0
    %166 = vmatpush2.msra.mxu0 %v92
    %167 = vmatprep.subr.mxu0 0.0
    %168 = vmatpush2.msra.mxu0 %v91
    %169 = vmatprep.subr.mxu0 0.0
    %170 = vmatpush2.msra.mxu0 %v90
    %171 = vmatprep.subr.mxu0 0.0
    %172 = vmatpush2.msra.mxu0 %v89
    %173 = vmatprep.subr.mxu0 0.0
    %174 = vmatpush2.msra.mxu0 %v88
    %175 = vmatprep.mubr.f32.mxu0 %v69
    %176 = vmatmul.mubr.f32.gmra.mxu0 %v68
    %v177 = vpop.f32.mrf.mxu0
    %v178 = vadd.f32 %v109, %v177
    %v179 = vpop.f32.mrf.mxu0
    %180 = vmatprep.mubr.f32.mxu0 %v71
    %181 = vmatmul.mubr.f32.gmra.mxu0 %v70
    %v182 = vpop.f32.mrf.mxu0
    %v183 = vadd.f32 %v109, %v182
    %v184 = vpop.f32.mrf.mxu0
    %185 = vdwg.mxu0
    %186 = vadd.xlane.f32.xlu0 %v178
    %v187 = vpop.xlane.xlu0 %186
    %188 = vadd.xlane.f32.xlu0 %v183
    %v189 = vpop.xlane.xlu0 %188
    %v190 = vrcp.pop 128.0
    %v191 = vmul.f32 %v187, %v190
    %v192 = vmul.f32 %v189, %v190
    %v193 = vmul.f32 %v178, %v178
    %v194 = vmul.f32 %v183, %v183
    %195 = vadd.xlane.f32.xlu0 %v193
    %v196 = vpop.xlane.xlu0 %195
    %197 = vadd.xlane.f32.xlu0 %v194
    %v198 = vpop.xlane.xlu0 %197
    %v199 = vmul.f32 %v196, %v190
    %v200 = vmul.f32 %v198, %v190
    %v201 = vmul.f32 %v191, %v191
    %v202 = vmul.f32 %v192, %v192
    %v203 = vsub.f32 %v199, %v201
    %v204 = vsub.f32 %v200, %v202
    %v205 = vmax.f32 %v203, 0.0
    %v206 = vmax.f32 %v204, 0.0
    %v207 = vsub.f32 %v178, %v191
    %v208 = vsub.f32 %v183, %v192
    %v209 = vadd.f32 %v205, 1e-05
    %v210 = vadd.f32 %v206, 1e-05
    %v211 = vrsqrt.pop %v209
    %v212 = vrsqrt.pop %v210
    %v213 = vmul.f32 %v207, %v211
    %v214 = vmul.f32 %v208, %v212
    %v215 = vld [vmem:[%s3] sm:$0x1]
    %v217 = vlaneseq
    %v218 = vshrl.u32 %v217, 7
    %v219 = vsub.s32 0, %v218
    %v220 = vrot.slane %v215, %v219
    %v222 = vmul.f32 %v213, %v220
    %v223 = vmul.f32 %v214, %v220
    %v224 = vld [vmem:[%s4] sm:$0x1]
    %v226 = vlaneseq
    %v227 = vshrl.u32 %v226, 7
    %v228 = vsub.s32 0, %v227
    %v229 = vrot.slane %v224, %v228
    %v231 = vadd.f32 %v222, %v229
    %v232 = vadd.f32 %v223, %v229
    %v233 = vmax.f32 %v231, 0.0
    %v234 = vmax.f32 %v232, 0.0
    %v235 = vld [vmem:[#allocation7] sm:$0xff]
    %v236 = vld [vmem:[#allocation7 + $0x8] sm:$0xff]
    %v237 = vld [vmem:[#allocation7 + $0x10] sm:$0xff]
    %v238 = vld [vmem:[#allocation7 + $0x18] sm:$0xff]
    %v239 = vld [vmem:[#allocation7 + $0x20] sm:$0xff]
    %v240 = vld [vmem:[#allocation7 + $0x28] sm:$0xff]
    %v241 = vld [vmem:[#allocation7 + $0x30] sm:$0xff]
    %v242 = vld [vmem:[#allocation7 + $0x38] sm:$0xff]
    %v243 = vld [vmem:[#allocation7 + $0x40] sm:$0xff]
    %v244 = vld [vmem:[#allocation7 + $0x48] sm:$0xff]
    %v245 = vld [vmem:[#allocation7 + $0x50] sm:$0xff]
    %v246 = vld [vmem:[#allocation7 + $0x58] sm:$0xff]
    %v247 = vld [vmem:[#allocation7 + $0x60] sm:$0xff]
    %v248 = vld [vmem:[#allocation7 + $0x68] sm:$0xff]
    %v249 = vld [vmem:[#allocation7 + $0x70] sm:$0xff]
    %v250 = vld [vmem:[#allocation7 + $0x78] sm:$0xff]
    %v251 = vld [vmem:[#allocation7 + $0x80] sm:$0xff]
    %v252 = vld [vmem:[#allocation7 + $0x88] sm:$0xff]
    %v253 = vld [vmem:[#allocation7 + $0x90] sm:$0xff]
    %v254 = vld [vmem:[#allocation7 + $0x98] sm:$0xff]
    %v255 = vld [vmem:[#allocation7 + $0xa0] sm:$0xff]
    %v256 = vld [vmem:[#allocation7 + $0xa8] sm:$0xff]
    %v257 = vld [vmem:[#allocation7 + $0xb0] sm:$0xff]
    %v258 = vld [vmem:[#allocation7 + $0xb8] sm:$0xff]
    %v259 = vld [vmem:[#allocation7 + $0xc0] sm:$0xff]
    %v260 = vld [vmem:[#allocation7 + $0xc8] sm:$0xff]
    %v261 = vld [vmem:[#allocation7 + $0xd0] sm:$0xff]
    %v262 = vld [vmem:[#allocation7 + $0xd8] sm:$0xff]
    %v263 = vld [vmem:[#allocation7 + $0xe0] sm:$0xff]
    %v264 = vld [vmem:[#allocation7 + $0xe8] sm:$0xff]
    %v265 = vld [vmem:[#allocation7 + $0xf0] sm:$0xff]
    %v266 = vld [vmem:[#allocation7 + $0xf8] sm:$0xff]
    %v267 = vld [vmem:[%s6] sm:$0x3]
    %v269 = vlaneseq
    %v270 = vshrl.u32 %v269, 7
    %v271 = vsub.s32 0, %v270
    %v272 = vrot.slane %v267, %v271
    %v273 = vlaneseq
    %v274 = vshrl.u32 %v273, 7
    %v275 = vsub.s32 1, %v274
    %v276 = vrot.slane %v267, %v275
    %279 = vmatprep.subr.mxu0 %v266
    %280 = vmatpush1.msra.mxu0 %v265
    %281 = vmatprep.subr.mxu0 %v264
    %282 = vmatpush1.msra.mxu0 %v263
    %283 = vmatprep.subr.mxu0 %v262
    %284 = vmatpush1.msra.mxu0 %v261
    %285 = vmatprep.subr.mxu0 %v260
    %286 = vmatpush1.msra.mxu0 %v259
    %287 = vmatprep.subr.mxu0 %v258
    %288 = vmatpush1.msra.mxu0 %v257
    %289 = vmatprep.subr.mxu0 %v256
    %290 = vmatpush1.msra.mxu0 %v255
    %291 = vmatprep.subr.mxu0 %v254
    %292 = vmatpush1.msra.mxu0 %v253
    %293 = vmatprep.subr.mxu0 %v252
    %294 = vmatpush1.msra.mxu0 %v251
    %295 = vmatprep.subr.mxu0 %v250
    %296 = vmatpush1.msra.mxu0 %v249
    %297 = vmatprep.subr.mxu0 %v248
    %298 = vmatpush1.msra.mxu0 %v247
    %299 = vmatprep.subr.mxu0 %v246
    %300 = vmatpush1.msra.mxu0 %v245
    %301 = vmatprep.subr.mxu0 %v244
    %302 = vmatpush1.msra.mxu0 %v243
    %303 = vmatprep.subr.mxu0 %v242
    %304 = vmatpush1.msra.mxu0 %v241
    %305 = vmatprep.subr.mxu0 %v240
    %306 = vmatpush1.msra.mxu0 %v239
    %307 = vmatprep.subr.mxu0 %v238
    %308 = vmatpush1.msra.mxu0 %v237
    %309 = vmatprep.subr.mxu0 %v236
    %310 = vmatpush1.msra.mxu0 %v235
    %311 = vmatprep.subr.mxu0 0.0
    %312 = vmatpush2.msra.mxu0 0.0
    %313 = vmatprep.subr.mxu0 0.0
    %314 = vmatpush2.msra.mxu0 0.0
    %315 = vmatprep.subr.mxu0 0.0
    %316 = vmatpush2.msra.mxu0 0.0
    %317 = vmatprep.subr.mxu0 0.0
    %318 = vmatpush2.msra.mxu0 0.0
    %319 = vmatprep.subr.mxu0 0.0
    %320 = vmatpush2.msra.mxu0 0.0
    %321 = vmatprep.subr.mxu0 0.0
    %322 = vmatpush2.msra.mxu0 0.0
    %323 = vmatprep.subr.mxu0 0.0
    %324 = vmatpush2.msra.mxu0 0.0
    %325 = vmatprep.subr.mxu0 0.0
    %326 = vmatpush2.msra.mxu0 0.0
    %327 = vmatprep.subr.mxu0 0.0
    %328 = vmatpush2.msra.mxu0 0.0
    %329 = vmatprep.subr.mxu0 0.0
    %330 = vmatpush2.msra.mxu0 0.0
    %331 = vmatprep.subr.mxu0 0.0
    %332 = vmatpush2.msra.mxu0 0.0
    %333 = vmatprep.subr.mxu0 0.0
    %334 = vmatpush2.msra.mxu0 0.0
    %335 = vmatprep.subr.mxu0 0.0
    %336 = vmatpush2.msra.mxu0 0.0
    %337 = vmatprep.subr.mxu0 0.0
    %338 = vmatpush2.msra.mxu0 0.0
    %339 = vmatprep.subr.mxu0 0.0
    %340 = vmatpush2.msra.mxu0 0.0
    %341 = vmatprep.subr.mxu0 0.0
    %342 = vmatpush2.msra.mxu0 0.0
    %343 = vmatprep.mubr.f32.mxu0 0.0
    %344 = vmatmul.mubr.f32.gmra.mxu0 %v233
    %v345 = vpop.f32.mrf.mxu0
    %v346 = vadd.f32 %v272, %v345
    %v347 = vpop.f32.mrf.mxu0
    %v348 = vadd.f32 %v276, %v347
    %349 = vmatprep.mubr.f32.mxu0 0.0
    %350 = vmatmul.mubr.f32.gmra.mxu0 %v234
    %v351 = vpop.f32.mrf.mxu0
    %v352 = vadd.f32 %v272, %v351
    %v353 = vpop.f32.mrf.mxu0
    %v354 = vadd.f32 %v276, %v353
    %355 = vdwg.mxu0
    %v356 = vxor.u32 %v346, 2147483648
    %v357 = vxor.u32 %v348, 2147483648
    %v358 = vxor.u32 %v352, 2147483648
    %v359 = vxor.u32 %v354, 2147483648
    %v360 = vmul.f32 %v356, 1.442695
    %v361 = vpow.pop %v360
    %v362 = vmul.f32 %v357, 1.442695
    %v363 = vpow.pop %v362
    %v364 = vmul.f32 %v358, 1.442695
    %v365 = vpow.pop %v364
    %v366 = vmul.f32 %v359, 1.442695
    %v367 = vpow.pop %v366
    %v368 = vadd.f32 %v361, 1.0
    %v369 = vadd.f32 %v363, 1.0
    %v370 = vadd.f32 %v365, 1.0
    %v371 = vadd.f32 %v367, 1.0
    %v372 = vrcp.pop %v368
    %v373 = vmul.f32 1.0, %v372
    %v374 = vrcp.pop %v369
    %v375 = vmul.f32 1.0, %v374
    %v376 = vrcp.pop %v370
    %v377 = vmul.f32 1.0, %v376
    %v378 = vrcp.pop %v371
    %v379 = vmul.f32 1.0, %v378
    %v380 = vadd.f32 %v373, 1.0
    %v381 = vadd.f32 %v375, 1.0
    %v382 = vadd.f32 %v377, 1.0
    %v383 = vadd.f32 %v379, 1.0
    %v384 = vmul.f32 %v68, %v380
    %v385 = vmul.f32 %v69, %v381
    %v386 = vmul.f32 %v70, %v382
    %v387 = vmul.f32 %v71, %v383
    %388 = vst [vmem:[#allocation8] sm:$0xff] %v384
    %389 = vst [vmem:[#allocation8 + $0x8] sm:$0xff] %v385
    %390 = vst [vmem:[#allocation8 + $0x10] sm:$0xff] %v386
    %391 = vst [vmem:[#allocation8 + $0x18] sm:$0xff] %v387
    // Predicated region
    $region42: #{glmix_forward.1} parent=1 // pred_check
      _
    $region43: #{glmix_forward.1} parent=1 // pred_check_branch
      %393 = sbr.rel (0) target = $region45
    $region44: #{glmix_forward.1} parent=1 // pred_region
      %s395 = ssub.s32 512, 512
      %396 = vsyncadd [#allocation4], %s395
      %s397 = sshll.u32 [#allocation8], 4
      %s398 = int_to_ptr.vmem [resolvable:$true] %s397
      %403 = dma.vmem_to_hbm [thread:$0]  %s398, 512, %s7, [#allocation4], 256, 256, 16
    $region45: #{glmix_forward.1} parent=1 // pred_fallthru
      _
    // Predicated region
    $region46: #{glmix_forward.1} parent=1 // pred_check
      _
    $region47: #{glmix_forward.1} parent=1 // pred_check_branch
      %405 = sbr.rel (0) target = $region49
    $region48: #{glmix_forward.1} parent=1 // pred_region
      %406 = dma.done [#allocation4], 512
    $region49: #{glmix_forward.1} parent=1 // pred_fallthru
      _
    %407 = vsyncpa [#allocation3], 1
    %408 = vsyncpa [#allocation6], 1
    %409 = vsyncpa [#allocation4], 1

</llo_original>
